<compile_context>
chip_gen: v5e
topology: v5e:2x2
jax: 0.10.0
libtpu: 0.0.40
codegen_flags: <defaults>
</compile_context>

<pallas_src>
import math

import numpy as np
import jax
import jax.numpy as jnp
from jax import lax
from jax.experimental import pallas as pl
from jax.experimental.pallas import tpu as pltpu


def _round_up(n, m):
    return (n + m - 1) // m * m


def _lcm(a, b):
    return a * b // math.gcd(a, b)


# ---------------------------------------------------------------------------
# Pass 1: partial per-lane sum / sum-of-squares of y = x_packed @ W_blockdiag, accumulated into a
# resident (8, gOC) block per megacore half.  Per-tile reduction only folds the vreg-major axis
# (pure VPU adds); the final sublane/g folds are done once in the wrapper.
# ---------------------------------------------------------------------------
def _stats_kernel(x_ref, w_ref, sum_ref, sq_ref):
    @pl.when(pl.program_id(1) == 0)
    def _():
        sum_ref[...] = jnp.zeros_like(sum_ref)
        sq_ref[...] = jnp.zeros_like(sq_ref)

    y = jnp.dot(x_ref[...], w_ref[...], preferred_element_type=jnp.float32)   # (tile, gOC)
    y3 = y.reshape(y.shape[0] // 8, 8, y.shape[1])                            # layout no-op
    sum_ref[...] += jnp.sum(y3, axis=0)                                       # (8, gOC)
    sq_ref[...] += jnp.sum(y3 * y3, axis=0)


# ---------------------------------------------------------------------------
# Pass 2: y = x_packed @ W_blockdiag, BN folded into one FMA, LeakyReLU(0.1), lane-dense store.
# ---------------------------------------------------------------------------
def _apply_kernel(x_ref, w_ref, scale_ref, shift_ref, o_ref):
    y = jnp.dot(x_ref[...], w_ref[...], preferred_element_type=jnp.float32)   # (tile, gOC)
    z = y * scale_ref[...] + shift_ref[...]
    o_ref[...] = jnp.maximum(z, 0.1 * z).astype(o_ref.dtype)                  # LeakyReLU(0.1)


def upsampling_block(x, weight, gamma, beta, *, eps=1e-5, tile_m=512,
                     matmul_dtype=jnp.float32, store_dtype=None):
    """UpsamplingBlock forward.

    x:      (N, C, H, W) float32
    weight: (OC, C, 1, 1)   -- 1x1 conv, stride 1, padding 0, bias=False (use_norm=True)
    gamma, beta: (OC,)      -- BatchNorm2d affine params (training-mode batch statistics)
    returns (N, OC, 2H, 2W)
    """
    N, C, H, W = x.shape
    OC = weight.shape[0]
    assert weight.shape == (OC, C, 1, 1), weight.shape
    matmul_dtype = np.dtype(matmul_dtype)
    store_dtype = np.dtype(jnp.float32 if store_dtype is None else store_dtype)

    # --- packing factor: g*C and g*OC are exact multiples of 128 (lane-dense loads AND stores) ---
    g = _lcm(128 // math.gcd(C, 128), 128 // math.gcd(OC, 128))
    gC, gOC = g * C, g * OC

    M = N * H * W
    Mg = pl.cdiv(M, g)                                   # packed rows before padding

    # --- tile sizing (in packed rows): big tiles for pipelining, clamped by problem & VMEM ---
    row_align = 8 if (matmul_dtype.itemsize >= 4 and store_dtype.itemsize >= 4) else 16
    tile = min(_round_up(tile_m, row_align),
               max(row_align, _round_up(pl.cdiv(Mg, 2), row_align)))

    def _step_bytes(t):          # double-buffered per-step footprint
        return 2 * ((t * gC + gC * gOC) * matmul_dtype.itemsize + t * gOC * store_dtype.itemsize)

    while tile > row_align and _step_bytes(tile) > 20 * 2**20:
        tile = max(row_align, (tile // 2) // row_align * row_align)

    nt = pl.cdiv(Mg, 2 * tile)                           # tiles per megacore half
    Mg_pad = 2 * nt * tile
    M_pad = Mg_pad * g

    # --- layout plumbing (pure XLA data movement) ---
    x2d = jnp.transpose(x, (0, 2, 3, 1)).reshape(M, C)   # NCHW -> NHWC -> (M, C)
    if M_pad != M:
        # Zero rows contribute nothing to sum / sumsq (no conv bias), so BN statistics stay exact
        # as long as we divide by the true M below.
        x2d = jnp.pad(x2d, ((0, M_pad - M), (0, 0)))
    xp = x2d.reshape(Mg_pad, gC).astype(matmul_dtype)    # g rows packed per matmul row

    w2d = weight.reshape(OC, C).T.astype(jnp.float32)    # (C, OC)
    eye = jnp.eye(g, dtype=jnp.float32)
    wbd = (eye[:, None, :, None] * w2d[None, :, None, :]).reshape(gC, gOC).astype(matmul_dtype)

    vmem_limit = int(min(48 * 2**20, max(8 * 2**20, 2 * _step_bytes(tile) + (1 << 20))))
    flops = 2 * Mg_pad * gC * gOC
    x_bytes = Mg_pad * gC * matmul_dtype.itemsize
    w_bytes = gC * gOC * matmul_dtype.itemsize

    # --- pass 1: global per-channel stats; 2 TC halves ("parallel") x M tiles ("arbitrary") ---
    ysum8, ysq8 = pl.pallas_call(
        _stats_kernel,
        out_shape=(jax.ShapeDtypeStruct((16, gOC), jnp.float32),
                   jax.ShapeDtypeStruct((16, gOC), jnp.float32)),
        grid=(2, nt),
        in_specs=[
            pl.BlockSpec((tile, gC), lambda c, i: (c * nt + i, 0)),
            pl.BlockSpec((gC, gOC), lambda c, i: (0, 0)),
        ],
        out_specs=(
            pl.BlockSpec((8, gOC), lambda c, i: (c, 0)),   # per-core resident accumulators
            pl.BlockSpec((8, gOC), lambda c, i: (c, 0)),
        ),
        compiler_params=pltpu.CompilerParams(
            dimension_semantics=("parallel", "arbitrary"),
            vmem_limit_bytes=vmem_limit),
        cost_estimate=pl.CostEstimate(
            flops=flops, transcendentals=0,
            bytes_accessed=x_bytes + w_bytes + 2 * 16 * gOC * 4),
    )(xp, wbd)

    # --- fold BN into one scale/shift (computed ONCE here, not per tile) ---
    inv_m = 1.0 / float(M)                               # true M, not the padded one
    ysum = jnp.sum(ysum8.reshape(16, g, OC), axis=(0, 1))
    ysq = jnp.sum(ysq8.reshape(16, g, OC), axis=(0, 1))
    mean = ysum * inv_m
    var = jnp.maximum(ysq * inv_m - mean * mean, 0.0)    # biased var (PyTorch BN) + clamp
    inv_std = lax.rsqrt(var + eps)
    scale = gamma.astype(jnp.float32) * inv_std          # (OC,)
    shift = beta.astype(jnp.float32) - mean * scale
    scale_p = jnp.tile(scale, g).reshape(1, gOC)         # lane layout matches the packing
    shift_p = jnp.tile(shift, g).reshape(1, gOC)

    # --- pass 2: conv matmul + BN FMA + LeakyReLU, tiled & parallel over packed rows ---
    outp = pl.pallas_call(
        _apply_kernel,
        out_shape=jax.ShapeDtypeStruct((Mg_pad, gOC), store_dtype),
        grid=(2 * nt,),
        in_specs=[
            pl.BlockSpec((tile, gC), lambda i: (i, 0)),
            pl.BlockSpec((gC, gOC), lambda i: (0, 0)),
            pl.BlockSpec((1, gOC), lambda i: (0, 0)),
            pl.BlockSpec((1, gOC), lambda i: (0, 0)),
        ],
        out_specs=pl.BlockSpec((tile, gOC), lambda i: (i, 0)),
        compiler_params=pltpu.CompilerParams(
            dimension_semantics=("parallel",),
            vmem_limit_bytes=vmem_limit),
        cost_estimate=pl.CostEstimate(
            flops=flops, transcendentals=0,
            bytes_accessed=x_bytes + w_bytes + Mg_pad * gOC * store_dtype.itemsize),
    )(xp, wbd, scale_p, shift_p)

    # --- unpack, back to NCHW, nearest 2x upsample as a single broadcast+reshape (XLA-fused) ---
    y = outp.reshape(Mg_pad * g, OC)[:M].reshape(N, H, W, OC)
    y = jnp.transpose(y, (0, 3, 1, 2))                   # NCHW
    # TODO(synk): fuse the 2x nearest duplication (and ideally the NHWC->NCHW transpose) directly
    # into pass-2's output BlockSpec to save a full-tensor HBM round trip; left to XLA for now.
    y = jnp.broadcast_to(y[:, :, :, None, :, None], (N, OC, H, 2, W, 2))
    y = y.reshape(N, OC, 2 * H, 2 * W)
    return y.astype(x.dtype)


def _reference(x, weight, gamma, beta, *, eps=1e-5):
    y = lax.conv_general_dilated(
        x, weight, (1, 1), [(0, 0), (0, 0)],
        dimension_numbers=("NCHW", "OIHW", "NCHW"))
    mean = y.mean(axis=(0, 2, 3), keepdims=True)
    var = y.var(axis=(0, 2, 3), keepdims=True)           # biased, like PyTorch BN normalization
    z = (y - mean) * lax.rsqrt(var + eps) * gamma.reshape(1, -1, 1, 1) + beta.reshape(1, -1, 1, 1)
    z = jnp.where(z >= 0, z, 0.1 * z)
    return jnp.repeat(jnp.repeat(z, 2, axis=2), 2, axis=3)


if __name__ == "__main__":
    key = jax.random.PRNGKey(0)
    k1, k2, k3, k4 = jax.random.split(key, 4)

    # UpsamplingBlock(in_channel=4, out_channel=8):
    #   ConvBlock(4, 8, kernel_size=1, stride=1, padding=0, use_norm=True) + Upsample(x2, nearest)
    N, C_in, H, W = 2, 4, 16, 16
    OC = 8

    x = jax.random.normal(k1, (N, C_in, H, W), jnp.float32)
    weight = 0.1 * jax.random.normal(k2, (OC, C_in, 1, 1), jnp.float32)   # no bias (use_norm=True)
    gamma = 1.0 + 0.1 * jax.random.normal(k3, (OC,), jnp.float32)
    beta = 0.1 * jax.random.normal(k4, (OC,), jnp.float32)

    out = jax.jit(upsampling_block)(x, weight, gamma, beta)
    out = jax.block_until_ready(out)

    ref = _reference(x, weight, gamma, beta)
    assert out.shape == (N, OC, 2 * H, 2 * W), out.shape
    err = float(jnp.abs(out - ref).max())
    assert jnp.allclose(out, ref, atol=1e-4, rtol=1e-4), err
    print("KERNEL_OK")
</pallas_src>

<mosaic_0001>
module attributes {stable_mosaic.version = 11 : i64} {
  func.func @_stats_kernel(%arg0: i32, %arg1: i32, %arg2: memref<8x128xf32, #tpu.memory_space<vmem>>, %arg3: memref<128x256xf32, #tpu.memory_space<vmem>>, %arg4: memref<8x256xf32, #tpu.memory_space<vmem>>, %arg5: memref<8x256xf32, #tpu.memory_space<vmem>>) attributes {dimension_semantics = [#tpu.dimension_semantics<parallel>, #tpu.dimension_semantics<arbitrary>], iteration_bounds = array<i64: 2, 1>, scalar_prefetch = 0 : i64, scratch_operands = 0 : i64, tpu.core_type = #tpu.core_type<tc>, window_params = [{transform_indices = @transform_0, window_bounds = array<i64: 8, 128>}, {pipeline_mode = #tpu.pipeline_mode<synchronous>, transform_indices = @transform_1, window_bounds = array<i64: 128, 256>}, {transform_indices = @transform_2, window_bounds = array<i64: 8, 256>}, {transform_indices = @transform_3, window_bounds = array<i64: 8, 256>}]} {
    %c0_i32 = arith.constant 0 : i32
    %0 = arith.cmpi eq, %arg1, %c0_i32 : i32
    %1 = arith.extui %0 : i1 to i32
    %c0_i32_0 = arith.constant 0 : i32
    %2 = arith.cmpi ne, %1, %c0_i32_0 : i32
    scf.if %2 {
      %cst_14 = arith.constant 0.000000e+00 : f32
      %16 = vector.broadcast %cst_14 : f32 to vector<8x256xf32>
      %c0_15 = arith.constant 0 : index
      %c0_16 = arith.constant 0 : index
      %17 = vector.load %arg4[%c0_15, %c0_16] : memref<8x256xf32, #tpu.memory_space<vmem>>, vector<8x256xf32>
      tpu.vector_store %arg4[%c0_15, %c0_16], %16 {strides = array<i32>} : memref<8x256xf32, #tpu.memory_space<vmem>>, vector<8x256xf32>,
      %cst_17 = arith.constant 0.000000e+00 : f32
      %18 = vector.broadcast %cst_17 : f32 to vector<8x256xf32>
      %c0_18 = arith.constant 0 : index
      %c0_19 = arith.constant 0 : index
      %19 = vector.load %arg5[%c0_18, %c0_19] : memref<8x256xf32, #tpu.memory_space<vmem>>, vector<8x256xf32>
      tpu.vector_store %arg5[%c0_18, %c0_19], %18 {strides = array<i32>} : memref<8x256xf32, #tpu.memory_space<vmem>>, vector<8x256xf32>,
    } else {
    }
    %c0 = arith.constant 0 : index
    %c0_1 = arith.constant 0 : index
    %3 = vector.load %arg2[%c0, %c0_1] : memref<8x128xf32, #tpu.memory_space<vmem>>, vector<8x128xf32>
    %c0_2 = arith.constant 0 : index
    %c0_3 = arith.constant 0 : index
    %4 = vector.load %arg3[%c0_2, %c0_3] : memref<128x256xf32, #tpu.memory_space<vmem>>, vector<128x256xf32>
    %cst = arith.constant dense<0.000000e+00> : vector<8x256xf32>
    %5 = tpu.matmul %3, %4, %cst {dimension_numbers = #tpu.dot_dimension_numbers<[1], [0], [0], [1], [0, 0, 1, 1], [], []>} : vector<8x128xf32>, vector<128x256xf32>, vector<8x256xf32> -> vector<8x256xf32>
    %6 = vector.shape_cast %5 : vector<8x256xf32> to vector<1x8x256xf32>
    %c0_4 = arith.constant 0 : index
    %c0_5 = arith.constant 0 : index
    %7 = vector.load %arg4[%c0_4, %c0_5] : memref<8x256xf32, #tpu.memory_space<vmem>>, vector<8x256xf32>
    %cst_6 = arith.constant dense<0.000000e+00> : vector<8x256xf32>
    %8 = vector.multi_reduction <add>, %6, %cst_6 [0] : vector<1x8x256xf32> to vector<8x256xf32>
    %9 = arith.addf %7, %8 : vector<8x256xf32>
    %c0_7 = arith.constant 0 : index
    %c0_8 = arith.constant 0 : index
    %10 = vector.load %arg4[%c0_7, %c0_8] : memref<8x256xf32, #tpu.memory_space<vmem>>, vector<8x256xf32>
    tpu.vector_store %arg4[%c0_7, %c0_8], %9 {strides = array<i32>} : memref<8x256xf32, #tpu.memory_space<vmem>>, vector<8x256xf32>,
    %c0_9 = arith.constant 0 : index
    %c0_10 = arith.constant 0 : index
    %11 = vector.load %arg5[%c0_9, %c0_10] : memref<8x256xf32, #tpu.memory_space<vmem>>, vector<8x256xf32>
    %12 = arith.mulf %6, %6 : vector<1x8x256xf32>
    %cst_11 = arith.constant dense<0.000000e+00> : vector<8x256xf32>
    %13 = vector.multi_reduction <add>, %12, %cst_11 [0] : vector<1x8x256xf32> to vector<8x256xf32>
    %14 = arith.addf %11, %13 : vector<8x256xf32>
    %c0_12 = arith.constant 0 : index
    %c0_13 = arith.constant 0 : index
    %15 = vector.load %arg5[%c0_12, %c0_13] : memref<8x256xf32, #tpu.memory_space<vmem>>, vector<8x256xf32>
    tpu.vector_store %arg5[%c0_12, %c0_13], %14 {strides = array<i32>} : memref<8x256xf32, #tpu.memory_space<vmem>>, vector<8x256xf32>,
    return
  }
  func.func @transform_0(%arg0: i32, %arg1: i32) -> (i32, i32) {
    %c1_i32 = arith.constant 1 : i32
    %0 = arith.muli %arg0, %c1_i32 : i32
    %1 = arith.addi %0, %arg1 : i32
    %c0_i32 = arith.constant 0 : i32
    %c0_i32_0 = arith.constant 0 : i32
    return %1, %c0_i32 : i32, i32
  }
  func.func @transform_1(%arg0: i32, %arg1: i32) -> (i32, i32) {
    %c0_i32 = arith.constant 0 : i32
    %c0_i32_0 = arith.constant 0 : i32
    %c0_i32_1 = arith.constant 0 : i32
    return %c0_i32, %c0_i32_0 : i32, i32
  }
  func.func @transform_2(%arg0: i32, %arg1: i32) -> (i32, i32) {
    %c0_i32 = arith.constant 0 : i32
    %c0_i32_0 = arith.constant 0 : i32
    return %arg0, %c0_i32 : i32, i32
  }
  func.func @transform_3(%arg0: i32, %arg1: i32) -> (i32, i32) {
    %c0_i32 = arith.constant 0 : i32
    %c0_i32_0 = arith.constant 0 : i32
    return %arg0, %c0_i32 : i32, i32
  }
}

module attributes {stable_mosaic.version = 11 : i64} {
  func.func @_apply_kernel(%arg0: i32, %arg1: memref<8x128xf32, #tpu.memory_space<vmem>>, %arg2: memref<128x256xf32, #tpu.memory_space<vmem>>, %arg3: memref<1x256xf32, #tpu.memory_space<vmem>>, %arg4: memref<1x256xf32, #tpu.memory_space<vmem>>, %arg5: memref<8x256xf32, #tpu.memory_space<vmem>>) attributes {dimension_semantics = [#tpu.dimension_semantics<parallel>], iteration_bounds = array<i64: 2>, scalar_prefetch = 0 : i64, scratch_operands = 0 : i64, tpu.core_type = #tpu.core_type<tc>, window_params = [{transform_indices = @transform_0, window_bounds = array<i64: 8, 128>}, {pipeline_mode = #tpu.pipeline_mode<synchronous>, transform_indices = @transform_1, window_bounds = array<i64: 128, 256>}, {pipeline_mode = #tpu.pipeline_mode<synchronous>, transform_indices = @transform_2, window_bounds = array<i64: 1, 256>}, {pipeline_mode = #tpu.pipeline_mode<synchronous>, transform_indices = @transform_3, window_bounds = array<i64: 1, 256>}, {transform_indices = @transform_4, window_bounds = array<i64: 8, 256>}]} {
    %c0 = arith.constant 0 : index
    %c0_0 = arith.constant 0 : index
    %0 = vector.load %arg1[%c0, %c0_0] : memref<8x128xf32, #tpu.memory_space<vmem>>, vector<8x128xf32>
    %c0_1 = arith.constant 0 : index
    %c0_2 = arith.constant 0 : index
    %1 = vector.load %arg2[%c0_1, %c0_2] : memref<128x256xf32, #tpu.memory_space<vmem>>, vector<128x256xf32>
    %cst = arith.constant dense<0.000000e+00> : vector<8x256xf32>
    %2 = tpu.matmul %0, %1, %cst {dimension_numbers = #tpu.dot_dimension_numbers<[1], [0], [0], [1], [0, 0, 1, 1], [], []>} : vector<8x128xf32>, vector<128x256xf32>, vector<8x256xf32> -> vector<8x256xf32>
    %c0_3 = arith.constant 0 : index
    %c0_4 = arith.constant 0 : index
    %3 = vector.load %arg3[%c0_3, %c0_4] : memref<1x256xf32, #tpu.memory_space<vmem>>, vector<1x256xf32>
    %4 = vector.broadcast %3 : vector<1x256xf32> to vector<8x256xf32>
    %5 = arith.mulf %2, %4 : vector<8x256xf32>
    %c0_5 = arith.constant 0 : index
    %c0_6 = arith.constant 0 : index
    %6 = vector.load %arg4[%c0_5, %c0_6] : memref<1x256xf32, #tpu.memory_space<vmem>>, vector<1x256xf32>
    %7 = vector.broadcast %6 : vector<1x256xf32> to vector<8x256xf32>
    %8 = arith.addf %5, %7 : vector<8x256xf32>
    %cst_7 = arith.constant 1.000000e-01 : f32
    %9 = vector.broadcast %cst_7 : f32 to vector<8x256xf32>
    %10 = arith.mulf %9, %8 : vector<8x256xf32>
    %11 = arith.maximumf %8, %10 : vector<8x256xf32>
    %c0_8 = arith.constant 0 : index
    %c0_9 = arith.constant 0 : index
    %12 = vector.load %arg5[%c0_8, %c0_9] : memref<8x256xf32, #tpu.memory_space<vmem>>, vector<8x256xf32>
    tpu.vector_store %arg5[%c0_8, %c0_9], %11 {strides = array<i32>} : memref<8x256xf32, #tpu.memory_space<vmem>>, vector<8x256xf32>,
    return
  }
  func.func @transform_0(%arg0: i32) -> (i32, i32) {
    %c0_i32 = arith.constant 0 : i32
    %c0_i32_0 = arith.constant 0 : i32
    return %arg0, %c0_i32 : i32, i32
  }
  func.func @transform_1(%arg0: i32) -> (i32, i32) {
    %c0_i32 = arith.constant 0 : i32
    %c0_i32_0 = arith.constant 0 : i32
    %c0_i32_1 = arith.constant 0 : i32
    return %c0_i32, %c0_i32_0 : i32, i32
  }
  func.func @transform_2(%arg0: i32) -> (i32, i32) {
    %c0_i32 = arith.constant 0 : i32
    %c0_i32_0 = arith.constant 0 : i32
    %c0_i32_1 = arith.constant 0 : i32
    return %c0_i32, %c0_i32_0 : i32, i32
  }
  func.func @transform_3(%arg0: i32) -> (i32, i32) {
    %c0_i32 = arith.constant 0 : i32
    %c0_i32_0 = arith.constant 0 : i32
    %c0_i32_1 = arith.constant 0 : i32
    return %c0_i32, %c0_i32_0 : i32, i32
  }
  func.func @transform_4(%arg0: i32) -> (i32, i32) {
    %c0_i32 = arith.constant 0 : i32
    %c0_i32_0 = arith.constant 0 : i32
    return %arg0, %c0_i32 : i32, i32
  }
}

</mosaic_0001>

<llo_original>
// kernel: upsampling_block.2
$region0: #{upsampling_block.2}
  #allocation0 [shape = 'u32[]', space=smem, size = 0x4, offset = 0x4, fixed_abs, tag = 'smem constant byte address 0x4 - core index']
  #allocation1 [shape = 'u32[72,128]{1,0:T(1,128)}', space=vmem, size = 0x9000, scoped, tag = 'internal scratch']
  %s0 = inlined_call_operand.vmem [shape: f32[16,128], index: 0, kind: input, shape index: {}]
  %s1 = inlined_call_operand.vmem [shape: f32[128,256], index: 1, kind: input, shape index: {}]
  %s2 = inlined_call_operand.vmem [shape: f32[16,256], index: 2, kind: output, shape index: {0}]
  %s3 = inlined_call_operand.vmem [shape: f32[16,256], index: 3, kind: output, shape index: {1}]
  %4 = xla_tuple %s2, %s3
  %s5 = sld [smem:[#allocation0]]
  $region53: #{upsampling_block.2} parent=0
    _
  %s7 = ssub.s32 1, %s5
  %s8 = scalar_select 0, %s7, %s5
  loop: start=0, step=1, limit=4
  $region2: #{upsampling_block.2} parent=0 // loop_pre_header
    _
  $region3: #{upsampling_block.2} parent=0 // loop_header
    %s10 = sphi 0, %s14
    %p11 = scmp.ge.s32.totalorder %s10, 4
    %s17 = sphi 0, %s29
    %s18 = sphi 0, %s25
    %s19 = sphi 0, %s17
    %s20 = sphi 0, %s18
    %s21 = sphi 0, %s19
    %s22 = sphi 0, %s20
    %s34 = sphi 0, %s36
    %s37 = sphi 0, %s34
    %s38 = sphi 0, %s37
    %s54 = sphi 0, %s38
    %s58 = sphi 0, %s58
    %s60 = sphi 0, %s58
    %s61 = sphi 0, %s60
    %s75 = sphi 0, %s61
    %s81 = sphi 0, %s83
    %s84 = sphi 0, %s81
    %s85 = sphi 0, %s84
    %s101 = sphi 0, %s85
    %s107 = sphi 0, %s109
    %s110 = sphi 0, %s107
    %s111 = sphi 0, %s110
    %s127 = sphi 0, %s111
  $region4: #{upsampling_block.2} parent=0 // loop_header_branch
    %13 = sbr.rel (%p11) target = $region8
  $region5: #{upsampling_block.2} parent=0 // loop_body
    %s15 = ssub.s32 %s10, 1
    %s16 = ssub.s32 %s10, 2
    %s23 = sadd.s32 1, %s18
    %p24 = scmp.ge.s32.totalorder %s23, 1
    %s25 = scalar_select %p24, 0, %s23
    %s26 = sadd.s32 1, %s17
    %s27 = scalar_select %p24, %s26, %s17
    %p28 = scmp.ge.s32.totalorder %s27, 2
    %s29 = scalar_select %p28, 0, %s27
    %s30 = sadd.s32 %s17, %s18
    %s31 = sadd.s32 %s29, %s25
    %s32 = ssub.s32 %s30, %s31
    %p33 = scmp.eq.s32.totalorder %s32, 0
    %s35 = sadd.s32 %s34, 1
    %s36 = scalar_select %p33, %s34, %s35
    %p39 = pneg %p33
    %p40 = scmp.eq.s32.totalorder %s10, 1
    %p41 = por %p39, %p40
    %p42 = scmp.ne.s32.totalorder %s34, %s37
    %p43 = scmp.eq.s32.totalorder %s10, 0
    %p44 = por %p42, %p43
    %p45 = scmp.ne.s32.totalorder %s34, %s37
    %p46 = scmp.eq.s32.totalorder %s15, 1
    %p47 = por %p45, %p46
    %p48 = scmp.ne.s32.totalorder %s37, %s38
    %p49 = scmp.eq.s32.totalorder %s15, 0
    %p50 = por %p48, %p49
    %p51 = scmp.ne.s32.totalorder %s37, %s38
    %p52 = scmp.eq.s32.totalorder %s16, 1
    %p53 = por %p51, %p52
    %p55 = scmp.ne.s32.totalorder %s38, %s54
    %p56 = scmp.eq.s32.totalorder %s16, 0
    %p57 = por %p55, %p56
    %s59 = sadd.s32 %s58, 1
    %p62 = scmp.eq.s32.totalorder %s10, 1
    %p63 = scmp.ne.s32.totalorder %s58, %s60
    %p64 = scmp.eq.s32.totalorder %s10, 0
    %p65 = por %p63, %p64
    %p66 = scmp.ne.s32.totalorder %s58, %s60
    %p67 = scmp.eq.s32.totalorder %s15, 1
    %p68 = por %p66, %p67
    %p69 = scmp.ne.s32.totalorder %s60, %s61
    %p70 = scmp.eq.s32.totalorder %s15, 0
    %p71 = por %p69, %p70
    %p72 = scmp.ne.s32.totalorder %s60, %s61
    %p73 = scmp.eq.s32.totalorder %s16, 1
    %p74 = por %p72, %p73
    %p76 = scmp.ne.s32.totalorder %s61, %s75
    %p77 = scmp.eq.s32.totalorder %s16, 0
    %p78 = por %p76, %p77
    %s79 = ssub.s32 %s17, %s29
    %p80 = scmp.eq.s32.totalorder %s79, 0
    %s82 = sadd.s32 %s81, 1
    %s83 = scalar_select %p80, %s81, %s82
    %p86 = pneg %p80
    %p87 = scmp.eq.s32.totalorder %s10, 1
    %p88 = por %p86, %p87
    %p89 = scmp.ne.s32.totalorder %s81, %s84
    %p90 = scmp.eq.s32.totalorder %s10, 0
    %p91 = por %p89, %p90
    %p92 = scmp.ne.s32.totalorder %s81, %s84
    %p93 = scmp.eq.s32.totalorder %s15, 1
    %p94 = por %p92, %p93
    %p95 = scmp.ne.s32.totalorder %s84, %s85
    %p96 = scmp.eq.s32.totalorder %s15, 0
    %p97 = por %p95, %p96
    %p98 = scmp.ne.s32.totalorder %s84, %s85
    %p99 = scmp.eq.s32.totalorder %s16, 1
    %p100 = por %p98, %p99
    %p102 = scmp.ne.s32.totalorder %s85, %s101
    %p103 = scmp.eq.s32.totalorder %s16, 0
    %p104 = por %p102, %p103
    %s105 = ssub.s32 %s17, %s29
    %p106 = scmp.eq.s32.totalorder %s105, 0
    %s108 = sadd.s32 %s107, 1
    %s109 = scalar_select %p106, %s107, %s108
    %p112 = pneg %p106
    %p113 = scmp.eq.s32.totalorder %s10, 1
    %p114 = por %p112, %p113
    %p115 = scmp.ne.s32.totalorder %s107, %s110
    %p116 = scmp.eq.s32.totalorder %s10, 0
    %p117 = por %p115, %p116
    %p118 = scmp.ne.s32.totalorder %s107, %s110
    %p119 = scmp.eq.s32.totalorder %s15, 1
    %p120 = por %p118, %p119
    %p121 = scmp.ne.s32.totalorder %s110, %s111
    %p122 = scmp.eq.s32.totalorder %s15, 0
    %p123 = por %p121, %p122
    %p124 = scmp.ne.s32.totalorder %s110, %s111
    %p125 = scmp.eq.s32.totalorder %s16, 1
    %p126 = por %p124, %p125
    %p128 = scmp.ne.s32.totalorder %s111, %s127
    %p129 = scmp.eq.s32.totalorder %s16, 0
    %p130 = por %p128, %p129
    %p131 = scmp.le.s32.totalorder 1, %s10
    %p132 = scmp.lt.s32.totalorder %s10, 3
    %p133 = pnand %p131, %p132
    %p134 = pneg %p133
    // Predicated region
    $region9: #{upsampling_block.2} parent=5 // pred_check
      _
    $region10: #{upsampling_block.2} parent=5 // pred_check_branch
      %136 = sbr.rel (%p133) target = $region12
    $region11: #{upsampling_block.2} parent=5 // pred_region
      %s137 = ssub.s32 %s10, 1
      // Predicated region
      $region13: #{upsampling_block.2} parent=11 // pred_check
        %p138 = pneg %p71
      $region14: #{upsampling_block.2} parent=11 // pred_check_branch
        %140 = sbr.rel (%p138) target = $region16
      $region15: #{upsampling_block.2} parent=11 // pred_region
        _
      $region16: #{upsampling_block.2} parent=11 // pred_fallthru
        _
    $region12: #{upsampling_block.2} parent=5 // pred_fallthru
      _
    %p141 = scmp.lt.s32.totalorder %s10, 2
    // Predicated region
    $region17: #{upsampling_block.2} parent=5 // pred_check
      %p142 = pneg %p141
    $region18: #{upsampling_block.2} parent=5 // pred_check_branch
      %144 = sbr.rel (%p142) target = $region20
    $region19: #{upsampling_block.2} parent=5 // pred_region
      // Predicated region
      $region21: #{upsampling_block.2} parent=19 // pred_check
        %p145 = pneg %p44
      $region22: #{upsampling_block.2} parent=19 // pred_check_branch
        %147 = sbr.rel (%p145) target = $region24
      $region23: #{upsampling_block.2} parent=19 // pred_region
        %s148 = sadd.s32 %s17, %s18
        %p149 = scmp.lt.s32.totalorder %s148, 1
        %s150 = scalar_select %p149, %s148, 1
        %s151 = smul.addr %s150, 8
        %s152 = scalar_lea.vmem %s0, %s151
        %s153 = sadd.s32 %s17, %s18
      $region24: #{upsampling_block.2} parent=19 // pred_fallthru
        _
    $region20: #{upsampling_block.2} parent=5 // pred_fallthru
      _
    %p154 = scmp.le.s32.totalorder 1, %s10
    %p155 = scmp.lt.s32.totalorder %s10, 3
    %p156 = pnand %p154, %p155
    %p157 = pneg %p156
    // Predicated region
    $region25: #{upsampling_block.2} parent=5 // pred_check
      _
    $region26: #{upsampling_block.2} parent=5 // pred_check_branch
      %159 = sbr.rel (%p156) target = $region28
    $region27: #{upsampling_block.2} parent=5 // pred_region
      %s160 = ssub.s32 %s10, 1
      %s161 = sadd.s32 %s19, %s20
      %p162 = scmp.lt.s32.totalorder %s161, 1
      %s163 = scalar_select %p162, %s161, 1
      %s164 = smul.addr %s163, 8
      %s165 = scalar_lea.vmem %s0, %s164
      %p166 = pneg %p50
      %p167 = pneg %p47
      %p168 = pneg %p71
      %p169 = pneg %p68
      %p170 = pneg %p97
      %p171 = pneg %p94
      %p172 = scmp.lt.s32.totalorder %s19, 1
      %s173 = scalar_select %p172, %s19, 1
      %s174 = smul.addr %s173, 2
      %s175 = smul.addr %s174, 8
      %s176 = scalar_lea.vmem %s2, %s175
      %p177 = pneg %p123
      %p178 = pneg %p120
      %p179 = scmp.lt.s32.totalorder %s19, 1
      %s180 = scalar_select %p179, %s19, 1
      %s181 = smul.addr %s180, 2
      %s182 = smul.addr %s181, 8
      %s183 = scalar_lea.vmem %s3, %s182
      %s184 = sadd.s32 %s19, %s20
      %p185 = scmp.lt.s32.totalorder %s184, 1
      %s186 = scalar_select %p185, %s184, 1
      %s187 = smul.addr %s186, 8
      %s188 = scalar_lea.vmem %s0, %s187
      %s189 = sadd.s32 %s19, %s20
      %p190 = scmp.lt.s32.totalorder %s19, 1
      %s191 = scalar_select %p190, %s19, 1
      %s192 = smul.addr %s191, 2
      %s193 = smul.addr %s192, 8
      %s194 = scalar_lea.vmem %s2, %s193
      %p195 = scmp.lt.s32.totalorder %s19, 1
      %s196 = scalar_select %p195, %s19, 1
      %s197 = smul.addr %s196, 2
      %s198 = smul.addr %s197, 8
      %s199 = scalar_lea.vmem %s3, %s198
      %p200 = scmp.eq.s32.totalorder %s20, 0
      // Predicated region
      $region29: #{upsampling_block.2} parent=27 // pred_check
        %p201 = pneg %p200
      $region30: #{upsampling_block.2} parent=27 // pred_check_branch
        %203 = sbr.rel (%p201) target = $region32
      $region31: #{upsampling_block.2} parent=27 // pred_region
        %204 = vst [vmem:[%s194] sm:$0xff] 0.0
        %205 = vst [vmem:[%s194 + $0x8] sm:$0xff] 0.0
        %206 = vst [vmem:[%s199] sm:$0xff] 0.0
        %207 = vst [vmem:[%s199 + $0x8] sm:$0xff] 0.0
      $region32: #{upsampling_block.2} parent=27 // pred_fallthru
        _
      %v208 = vld [vmem:[%s188] sm:$0xff]
      %v209 = vld [vmem:[%s1] sm:$0xff]
      %v210 = vld [vmem:[%s1 + $0x8] sm:$0xff]
      %v211 = vld [vmem:[%s1 + $0x10] sm:$0xff]
      %v212 = vld [vmem:[%s1 + $0x18] sm:$0xff]
      %v213 = vld [vmem:[%s1 + $0x20] sm:$0xff]
      %v214 = vld [vmem:[%s1 + $0x28] sm:$0xff]
      %v215 = vld [vmem:[%s1 + $0x30] sm:$0xff]
      %v216 = vld [vmem:[%s1 + $0x38] sm:$0xff]
      %v217 = vld [vmem:[%s1 + $0x40] sm:$0xff]
      %v218 = vld [vmem:[%s1 + $0x48] sm:$0xff]
      %v219 = vld [vmem:[%s1 + $0x50] sm:$0xff]
      %v220 = vld [vmem:[%s1 + $0x58] sm:$0xff]
      %v221 = vld [vmem:[%s1 + $0x60] sm:$0xff]
      %v222 = vld [vmem:[%s1 + $0x68] sm:$0xff]
      %v223 = vld [vmem:[%s1 + $0x70] sm:$0xff]
      %v224 = vld [vmem:[%s1 + $0x78] sm:$0xff]
      %v225 = vld [vmem:[%s1 + $0x80] sm:$0xff]
      %v226 = vld [vmem:[%s1 + $0x88] sm:$0xff]
      %v227 = vld [vmem:[%s1 + $0x90] sm:$0xff]
      %v228 = vld [vmem:[%s1 + $0x98] sm:$0xff]
      %v229 = vld [vmem:[%s1 + $0xa0] sm:$0xff]
      %v230 = vld [vmem:[%s1 + $0xa8] sm:$0xff]
      %v231 = vld [vmem:[%s1 + $0xb0] sm:$0xff]
      %v232 = vld [vmem:[%s1 + $0xb8] sm:$0xff]
      %v233 = vld [vmem:[%s1 + $0xc0] sm:$0xff]
      %v234 = vld [vmem:[%s1 + $0xc8] sm:$0xff]
      %v235 = vld [vmem:[%s1 + $0xd0] sm:$0xff]
      %v236 = vld [vmem:[%s1 + $0xd8] sm:$0xff]
      %v237 = vld [vmem:[%s1 + $0xe0] sm:$0xff]
      %v238 = vld [vmem:[%s1 + $0xe8] sm:$0xff]
      %v239 = vld [vmem:[%s1 + $0xf0] sm:$0xff]
      %v240 = vld [vmem:[%s1 + $0xf8] sm:$0xff]
      %241 = vmatpush.msra.mxu0 %v239
      %242 = vmatpush.msra.mxu0 %v237
      %243 = vmatpush.msra.mxu0 %v235
      %244 = vmatpush.msra.mxu0 %v233
      %245 = vmatpush.msra.mxu0 %v231
      %246 = vmatpush.msra.mxu0 %v229
      %247 = vmatpush.msra.mxu0 %v227
      %248 = vmatpush.msra.mxu0 %v225
      %249 = vmatpush.msra.mxu0 %v223
      %250 = vmatpush.msra.mxu0 %v221
      %251 = vmatpush.msra.mxu0 %v219
      %252 = vmatpush.msra.mxu0 %v217
      %253 = vmatpush.msra.mxu0 %v215
      %254 = vmatpush.msra.mxu0 %v213
      %255 = vmatpush.msra.mxu0 %v211
      %256 = vmatpush.msra.mxu0 %v209
      %257 = vmatmul.f32.gmra.mxu0 %v208
      %v258 = vpop.f32.mrf.mxu0
      %v259 = vadd.f32 0.0, %v258
      %260 = vdwg.mxu0
      %261 = vmatpush.msra.mxu0 %v240
      %262 = vmatpush.msra.mxu0 %v238
      %263 = vmatpush.msra.mxu0 %v236
      %264 = vmatpush.msra.mxu0 %v234
      %265 = vmatpush.msra.mxu0 %v232
      %266 = vmatpush.msra.mxu0 %v230
      %267 = vmatpush.msra.mxu0 %v228
      %268 = vmatpush.msra.mxu0 %v226
      %269 = vmatpush.msra.mxu0 %v224
      %270 = vmatpush.msra.mxu0 %v222
      %271 = vmatpush.msra.mxu0 %v220
      %272 = vmatpush.msra.mxu0 %v218
      %273 = vmatpush.msra.mxu0 %v216
      %274 = vmatpush.msra.mxu0 %v214
      %275 = vmatpush.msra.mxu0 %v212
      %276 = vmatpush.msra.mxu0 %v210
      %277 = vmatmul.f32.gmra.mxu0 %v208
      %v278 = vpop.f32.mrf.mxu0
      %v279 = vadd.f32 0.0, %v278
      %280 = vdwg.mxu0
      %v281 = vld [vmem:[%s194] sm:$0xff]
      %v282 = vld [vmem:[%s194 + $0x8] sm:$0xff]
      %v283 = vadd.f32 %v259, 0.0
      %v284 = vadd.f32 %v279, 0.0
      %v285 = vadd.f32 %v281, %v283
      %v286 = vadd.f32 %v282, %v284
      %287 = vst [vmem:[%s194] sm:$0xff] %v285
      %288 = vst [vmem:[%s194 + $0x8] sm:$0xff] %v286
      %v289 = vld [vmem:[%s199] sm:$0xff]
      %v290 = vld [vmem:[%s199 + $0x8] sm:$0xff]
      %v291 = vmul.f32 %v259, %v259
      %v292 = vmul.f32 %v279, %v279
      %v293 = vadd.f32 %v291, 0.0
      %v294 = vadd.f32 %v292, 0.0
      %v295 = vadd.f32 %v289, %v293
      %v296 = vadd.f32 %v290, %v294
      %297 = vst [vmem:[%s199] sm:$0xff] %v295
      %298 = vst [vmem:[%s199 + $0x8] sm:$0xff] %v296
      %p299 = scmp.lt.s32.totalorder %s19, 1
      %s300 = scalar_select %p299, %s19, 1
      %s301 = smul.addr %s300, 2
      %s302 = smul.addr %s301, 8
      %s303 = scalar_lea.vmem %s2, %s302
      %p304 = scmp.lt.s32.totalorder %s19, 1
      %s305 = scalar_select %p304, %s19, 1
      %s306 = smul.addr %s305, 2
      %s307 = smul.addr %s306, 8
      %s308 = scalar_lea.vmem %s3, %s307
      // Predicated region
      $region33: #{upsampling_block.2} parent=27 // pred_check
        %p309 = pneg %p94
      $region34: #{upsampling_block.2} parent=27 // pred_check_branch
        %311 = sbr.rel (%p309) target = $region36
      $region35: #{upsampling_block.2} parent=27 // pred_region
        _
      $region36: #{upsampling_block.2} parent=27 // pred_fallthru
        _
      // Predicated region
      $region37: #{upsampling_block.2} parent=27 // pred_check
        %p312 = pneg %p120
      $region38: #{upsampling_block.2} parent=27 // pred_check_branch
        %314 = sbr.rel (%p312) target = $region40
      $region39: #{upsampling_block.2} parent=27 // pred_region
        _
      $region40: #{upsampling_block.2} parent=27 // pred_fallthru
        _
    $region28: #{upsampling_block.2} parent=5 // pred_fallthru
      _
    %p315 = scmp.le.s32.totalorder 2, %s10
    // Predicated region
    $region41: #{upsampling_block.2} parent=5 // pred_check
      %p316 = pneg %p315
    $region42: #{upsampling_block.2} parent=5 // pred_check_branch
      %318 = sbr.rel (%p316) target = $region44
    $region43: #{upsampling_block.2} parent=5 // pred_region
      %s319 = ssub.s32 %s10, 2
      // Predicated region
      $region45: #{upsampling_block.2} parent=43 // pred_check
        %p320 = pneg %p100
      $region46: #{upsampling_block.2} parent=43 // pred_check_branch
        %322 = sbr.rel (%p320) target = $region48
      $region47: #{upsampling_block.2} parent=43 // pred_region
        %p323 = scmp.lt.s32.totalorder %s21, 1
        %s324 = scalar_select %p323, %s21, 1
        %s325 = smul.addr %s324, 2
        %s326 = smul.addr %s325, 8
        %s327 = scalar_lea.vmem %s2, %s326
      $region48: #{upsampling_block.2} parent=43 // pred_fallthru
        _
      // Predicated region
      $region49: #{upsampling_block.2} parent=43 // pred_check
        %p328 = pneg %p126
      $region50: #{upsampling_block.2} parent=43 // pred_check_branch
        %330 = sbr.rel (%p328) target = $region52
      $region51: #{upsampling_block.2} parent=43 // pred_region
        %p331 = scmp.lt.s32.totalorder %s21, 1
        %s332 = scalar_select %p331, %s21, 1
        %s333 = smul.addr %s332, 2
        %s334 = smul.addr %s333, 8
        %s335 = scalar_lea.vmem %s3, %s334
      $region52: #{upsampling_block.2} parent=43 // pred_fallthru
        _
    $region44: #{upsampling_block.2} parent=5 // pred_fallthru
      _
  $region6: #{upsampling_block.2} parent=0 // loop_footer
    %s14 = sadd.s32 1, %s10
  $region7: #{upsampling_block.2} parent=0 // loop_footer_branch
    %9 = sbr.rel target = $region3
  $region8: #{upsampling_block.2} parent=0 // loop_exit
    _

// kernel: tile.13
$region0: #{tile.13}
  #allocation0 [shape = 's32[1]{0}', space=sflag, size = 0x4, scoped, tag = 'scoped memory for tile.13']
  %s0 = inlined_call_operand.vmem [shape: f32[8], index: 0, kind: input, shape index: {}]
  %s1 = inlined_call_operand.vmem [shape: f32[32,8], index: 1, kind: output, shape index: {}]
  // Predicated region
  $region2: #{tile.13} parent=0 // pred_check
    _
  $region3: #{tile.13} parent=0 // pred_check_branch
    %3 = sbr.rel (0) target = $region5
  $region4: #{tile.13} parent=0 // pred_region
    _
  $region5: #{tile.13} parent=0 // pred_fallthru
    _
  %v4 = vld [vmem:[%s0] ss:$0 sm:$0xff]
  %5 = vst [vmem:[%s1] sm:$0xff] %v4
  %s6 = scalar_lea.vmem %s1, 8
  %7 = vst [vmem:[%s6] sm:$0xff] %v4
  %s8 = scalar_lea.vmem %s1, 16
  %9 = vst [vmem:[%s8] sm:$0xff] %v4
  %s10 = scalar_lea.vmem %s1, 24
  %11 = vst [vmem:[%s10] sm:$0xff] %v4

// kernel: tile.14
$region0: #{tile.14}
  %s0 = inlined_call_operand.vmem [shape: f32[32,8], index: 0, kind: input, shape index: {}]
  %s1 = inlined_call_operand.vmem [shape: f32[1,256], index: 1, kind: output, shape index: {}]
  $region1: #{tile.14} parent=0
    #allocation0 [shape = 'u8[8192]{0}', space=vmem, size = 0x2000, scoped, tag = 'scoped mem for output reshape']
    %s2 = smov 3
    %v3 = vld [vmem:[%s0] ss:$16 sm:%s2]
    %vm4 = vcmask 64512
    %5 = vst.msk [vmem:[#allocation0] ss:$8 sm:$0x3] %vm4, %v3
    %s6 = scalar_lea.vmem %s0, 15
    %s7 = smov 3
    %v8 = vld [vmem:[%s6] ss:$16 sm:%s7]
    %9 = vrot.lane.b32.xlu0 %v8, 120
    %v10 = vpop.permute.xlu0 %9
    %vm11 = vcmask 1048512
    %12 = vst.msk [vmem:[#allocation0] ss:$8 sm:$0x3] %vm11, %v10
    %s13 = scalar_lea.vmem %s0, 14
    %s14 = smov 3
    %v15 = vld [vmem:[%s13] ss:$16 sm:%s14]
    %16 = vrot.lane.b32.xlu0 %v15, 112
    %v17 = vpop.permute.xlu0 %16
    %vm18 = vcmask 982912
    %19 = vst.msk [vmem:[#allocation0] ss:$8 sm:$0x3] %vm18, %v17
    %s20 = scalar_lea.vmem %s0, 13
    %s21 = smov 3
    %v22 = vld [vmem:[%s20] ss:$16 sm:%s21]
    %23 = vrot.lane.b32.xlu0 %v22, 104
    %v24 = vpop.permute.xlu0 %23
    %vm25 = vcmask 917312
    %26 = vst.msk [vmem:[#allocation0] ss:$8 sm:$0x3] %vm25, %v24
    %s27 = scalar_lea.vmem %s0, 12
    %s28 = smov 3
    %v29 = vld [vmem:[%s27] ss:$16 sm:%s28]
    %30 = vrot.lane.b32.xlu0 %v29, 96
    %v31 = vpop.permute.xlu0 %30
    %vm32 = vcmask 851712
    %33 = vst.msk [vmem:[#allocation0] ss:$8 sm:$0x3] %vm32, %v31
    %s34 = scalar_lea.vmem %s0, 11
    %s35 = smov 3
    %v36 = vld [vmem:[%s34] ss:$16 sm:%s35]
    %37 = vrot.lane.b32.xlu0 %v36, 88
    %v38 = vpop.permute.xlu0 %37
    %vm39 = vcmask 786112
    %40 = vst.msk [vmem:[#allocation0] ss:$8 sm:$0x3] %vm39, %v38
    %s41 = scalar_lea.vmem %s0, 10
    %s42 = smov 3
    %v43 = vld [vmem:[%s41] ss:$16 sm:%s42]
    %44 = vrot.lane.b32.xlu0 %v43, 80
    %v45 = vpop.permute.xlu0 %44
    %vm46 = vcmask 720512
    %47 = vst.msk [vmem:[#allocation0] ss:$8 sm:$0x3] %vm46, %v45
    %s48 = scalar_lea.vmem %s0, 9
    %s49 = smov 3
    %v50 = vld [vmem:[%s48] ss:$16 sm:%s49]
    %51 = vrot.lane.b32.xlu0 %v50, 72
    %v52 = vpop.permute.xlu0 %51
    %vm53 = vcmask 654912
    %54 = vst.msk [vmem:[#allocation0] ss:$8 sm:$0x3] %vm53, %v52
    %s55 = scalar_lea.vmem %s0, 8
    %s56 = smov 3
    %v57 = vld [vmem:[%s55] ss:$16 sm:%s56]
    %58 = vrot.lane.b32.xlu0 %v57, 64
    %v59 = vpop.permute.xlu0 %58
    %vm60 = vcmask 589312
    %61 = vst.msk [vmem:[#allocation0] ss:$8 sm:$0x3] %vm60, %v59
    %s62 = scalar_lea.vmem %s0, 7
    %s63 = smov 3
    %v64 = vld [vmem:[%s62] ss:$16 sm:%s63]
    %65 = vrot.lane.b32.xlu0 %v64, 56
    %v66 = vpop.permute.xlu0 %65
    %vm67 = vcmask 523712
    %68 = vst.msk [vmem:[#allocation0] ss:$8 sm:$0x3] %vm67, %v66
    %s69 = scalar_lea.vmem %s0, 6
    %s70 = smov 3
    %v71 = vld [vmem:[%s69] ss:$16 sm:%s70]
    %72 = vrot.lane.b32.xlu0 %v71, 48
    %v73 = vpop.permute.xlu0 %72
    %vm74 = vcmask 458112
    %75 = vst.msk [vmem:[#allocation0] ss:$8 sm:$0x3] %vm74, %v73
    %s76 = scalar_lea.vmem %s0, 5
    %s77 = smov 3
    %v78 = vld [vmem:[%s76] ss:$16 sm:%s77]
    %79 = vrot.lane.b32.xlu0 %v78, 40
    %v80 = vpop.permute.xlu0 %79
    %vm81 = vcmask 392512
    %82 = vst.msk [vmem:[#allocation0] ss:$8 sm:$0x3] %vm81, %v80
    %s83 = scalar_lea.vmem %s0, 4
    %s84 = smov 3
    %v85 = vld [vmem:[%s83] ss:$16 sm:%s84]
    %86 = vrot.lane.b32.xlu0 %v85, 32
    %v87 = vpop.permute.xlu0 %86
    %vm88 = vcmask 326912
    %89 = vst.msk [vmem:[#allocation0] ss:$8 sm:$0x3] %vm88, %v87
    %s90 = scalar_lea.vmem %s0, 3
    %s91 = smov 3
    %v92 = vld [vmem:[%s90] ss:$16 sm:%s91]
    %93 = vrot.lane.b32.xlu0 %v92, 24
    %v94 = vpop.permute.xlu0 %93
    %vm95 = vcmask 261312
    %96 = vst.msk [vmem:[#allocation0] ss:$8 sm:$0x3] %vm95, %v94
    %s97 = scalar_lea.vmem %s0, 2
    %s98 = smov 3
    %v99 = vld [vmem:[%s97] ss:$16 sm:%s98]
    %100 = vrot.lane.b32.xlu0 %v99, 16
    %v101 = vpop.permute.xlu0 %100
    %vm102 = vcmask 195712
    %103 = vst.msk [vmem:[#allocation0] ss:$8 sm:$0x3] %vm102, %v101
    %s104 = scalar_lea.vmem %s0, 1
    %s105 = smov 3
    %v106 = vld [vmem:[%s104] ss:$16 sm:%s105]
    %107 = vrot.lane.b32.xlu0 %v106, 8
    %v108 = vpop.permute.xlu0 %107
    %vm109 = vcmask 130112
    %110 = vst.msk [vmem:[#allocation0] ss:$8 sm:$0x3] %vm109, %v108
    %s112 = ssub.s32 2, 1
    %v113 = vld [vmem:[#allocation0] sm:%s112]
    %s115 = ssub.s32 2, 1
    %116 = vst [vmem:[%s1] sm:%s115] %v113
    %s117 = scalar_lea.vmem [#allocation0], 8
    %v118 = vld [vmem:[%s117] sm:%s112]
    %s120 = ssub.s32 2, 1
    %s121 = scalar_lea.vmem %s1, 1
    %122 = vst [vmem:[%s121] sm:%s120] %v118

// kernel: upsampling_block.3
$region0: #{upsampling_block.3}
  #allocation0 [shape = 'u32[]', space=smem, size = 0x4, offset = 0x4, fixed_abs, tag = 'smem constant byte address 0x4 - core index']
  #allocation1 [shape = 'u32[72,128]{1,0:T(1,128)}', space=vmem, size = 0x9000, scoped, tag = 'internal scratch']
  %s0 = inlined_call_operand.vmem [shape: f32[16,128], index: 0, kind: input, shape index: {}]
  %s1 = inlined_call_operand.vmem [shape: f32[128,256], index: 1, kind: input, shape index: {}]
  %s2 = inlined_call_operand.vmem [shape: f32[1,256], index: 2, kind: input, shape index: {}]
  %s3 = inlined_call_operand.vmem [shape: f32[1,256], index: 3, kind: input, shape index: {}]
  %s4 = inlined_call_operand.vmem [shape: f32[16,256], index: 4, kind: output, shape index: {}]
  %s5 = sld [smem:[#allocation0]]
  $region49: #{upsampling_block.3} parent=0
    _
  %s7 = ssub.s32 1, %s5
  %s8 = scalar_select 0, %s7, %s5
  loop: start=0, step=1, limit=4
  $region2: #{upsampling_block.3} parent=0 // loop_pre_header
    _
  $region3: #{upsampling_block.3} parent=0 // loop_header
    %s10 = sphi 0, %s14
    %p11 = scmp.ge.s32.totalorder %s10, 4
    %s20 = sphi 0, %s22
    %s23 = sphi 0, %s20
    %s24 = sphi 0, %s23
    %s40 = sphi 0, %s24
    %s44 = sphi 0, %s44
    %s46 = sphi 0, %s44
    %s47 = sphi 0, %s46
    %s61 = sphi 0, %s47
    %s65 = sphi 0, %s65
    %s67 = sphi 0, %s65
    %s68 = sphi 0, %s67
    %s82 = sphi 0, %s68
    %s86 = sphi 0, %s86
    %s88 = sphi 0, %s86
    %s89 = sphi 0, %s88
    %s103 = sphi 0, %s89
    %s109 = sphi 0, %s111
    %s112 = sphi 0, %s109
    %s113 = sphi 0, %s112
    %s129 = sphi 0, %s113
  $region4: #{upsampling_block.3} parent=0 // loop_header_branch
    %13 = sbr.rel (%p11) target = $region8
  $region5: #{upsampling_block.3} parent=0 // loop_body
    %s15 = ssub.s32 %s10, 1
    %s16 = ssub.s32 %s10, 2
    %s17 = sadd.s32 %s10, 1
    %s18 = ssub.s32 %s10, %s17
    %p19 = scmp.eq.s32.totalorder %s18, 0
    %s21 = sadd.s32 %s20, 1
    %s22 = scalar_select %p19, %s20, %s21
    %p25 = pneg %p19
    %p26 = scmp.eq.s32.totalorder %s10, 1
    %p27 = por %p25, %p26
    %p28 = scmp.ne.s32.totalorder %s20, %s23
    %p29 = scmp.eq.s32.totalorder %s10, 0
    %p30 = por %p28, %p29
    %p31 = scmp.ne.s32.totalorder %s20, %s23
    %p32 = scmp.eq.s32.totalorder %s15, 1
    %p33 = por %p31, %p32
    %p34 = scmp.ne.s32.totalorder %s23, %s24
    %p35 = scmp.eq.s32.totalorder %s15, 0
    %p36 = por %p34, %p35
    %p37 = scmp.ne.s32.totalorder %s23, %s24
    %p38 = scmp.eq.s32.totalorder %s16, 1
    %p39 = por %p37, %p38
    %p41 = scmp.ne.s32.totalorder %s24, %s40
    %p42 = scmp.eq.s32.totalorder %s16, 0
    %p43 = por %p41, %p42
    %s45 = sadd.s32 %s44, 1
    %p48 = scmp.eq.s32.totalorder %s10, 1
    %p49 = scmp.ne.s32.totalorder %s44, %s46
    %p50 = scmp.eq.s32.totalorder %s10, 0
    %p51 = por %p49, %p50
    %p52 = scmp.ne.s32.totalorder %s44, %s46
    %p53 = scmp.eq.s32.totalorder %s15, 1
    %p54 = por %p52, %p53
    %p55 = scmp.ne.s32.totalorder %s46, %s47
    %p56 = scmp.eq.s32.totalorder %s15, 0
    %p57 = por %p55, %p56
    %p58 = scmp.ne.s32.totalorder %s46, %s47
    %p59 = scmp.eq.s32.totalorder %s16, 1
    %p60 = por %p58, %p59
    %p62 = scmp.ne.s32.totalorder %s47, %s61
    %p63 = scmp.eq.s32.totalorder %s16, 0
    %p64 = por %p62, %p63
    %s66 = sadd.s32 %s65, 1
    %p69 = scmp.eq.s32.totalorder %s10, 1
    %p70 = scmp.ne.s32.totalorder %s65, %s67
    %p71 = scmp.eq.s32.totalorder %s10, 0
    %p72 = por %p70, %p71
    %p73 = scmp.ne.s32.totalorder %s65, %s67
    %p74 = scmp.eq.s32.totalorder %s15, 1
    %p75 = por %p73, %p74
    %p76 = scmp.ne.s32.totalorder %s67, %s68
    %p77 = scmp.eq.s32.totalorder %s15, 0
    %p78 = por %p76, %p77
    %p79 = scmp.ne.s32.totalorder %s67, %s68
    %p80 = scmp.eq.s32.totalorder %s16, 1
    %p81 = por %p79, %p80
    %p83 = scmp.ne.s32.totalorder %s68, %s82
    %p84 = scmp.eq.s32.totalorder %s16, 0
    %p85 = por %p83, %p84
    %s87 = sadd.s32 %s86, 1
    %p90 = scmp.eq.s32.totalorder %s10, 1
    %p91 = scmp.ne.s32.totalorder %s86, %s88
    %p92 = scmp.eq.s32.totalorder %s10, 0
    %p93 = por %p91, %p92
    %p94 = scmp.ne.s32.totalorder %s86, %s88
    %p95 = scmp.eq.s32.totalorder %s15, 1
    %p96 = por %p94, %p95
    %p97 = scmp.ne.s32.totalorder %s88, %s89
    %p98 = scmp.eq.s32.totalorder %s15, 0
    %p99 = por %p97, %p98
    %p100 = scmp.ne.s32.totalorder %s88, %s89
    %p101 = scmp.eq.s32.totalorder %s16, 1
    %p102 = por %p100, %p101
    %p104 = scmp.ne.s32.totalorder %s89, %s103
    %p105 = scmp.eq.s32.totalorder %s16, 0
    %p106 = por %p104, %p105
    %s107 = ssub.s32 %s10, %s17
    %p108 = scmp.eq.s32.totalorder %s107, 0
    %s110 = sadd.s32 %s109, 1
    %s111 = scalar_select %p108, %s109, %s110
    %p114 = pneg %p108
    %p115 = scmp.eq.s32.totalorder %s10, 1
    %p116 = por %p114, %p115
    %p117 = scmp.ne.s32.totalorder %s109, %s112
    %p118 = scmp.eq.s32.totalorder %s10, 0
    %p119 = por %p117, %p118
    %p120 = scmp.ne.s32.totalorder %s109, %s112
    %p121 = scmp.eq.s32.totalorder %s15, 1
    %p122 = por %p120, %p121
    %p123 = scmp.ne.s32.totalorder %s112, %s113
    %p124 = scmp.eq.s32.totalorder %s15, 0
    %p125 = por %p123, %p124
    %p126 = scmp.ne.s32.totalorder %s112, %s113
    %p127 = scmp.eq.s32.totalorder %s16, 1
    %p128 = por %p126, %p127
    %p130 = scmp.ne.s32.totalorder %s113, %s129
    %p131 = scmp.eq.s32.totalorder %s16, 0
    %p132 = por %p130, %p131
    %p133 = scmp.le.s32.totalorder 1, %s10
    %p134 = scmp.lt.s32.totalorder %s10, 3
    %p135 = pnand %p133, %p134
    %p136 = pneg %p135
    // Predicated region
    $region9: #{upsampling_block.3} parent=5 // pred_check
      _
    $region10: #{upsampling_block.3} parent=5 // pred_check_branch
      %138 = sbr.rel (%p135) target = $region12
    $region11: #{upsampling_block.3} parent=5 // pred_region
      %s139 = ssub.s32 %s10, 1
      // Predicated region
      $region13: #{upsampling_block.3} parent=11 // pred_check
        %p140 = pneg %p57
      $region14: #{upsampling_block.3} parent=11 // pred_check_branch
        %142 = sbr.rel (%p140) target = $region16
      $region15: #{upsampling_block.3} parent=11 // pred_region
        _
      $region16: #{upsampling_block.3} parent=11 // pred_fallthru
        _
      // Predicated region
      $region17: #{upsampling_block.3} parent=11 // pred_check
        %p143 = pneg %p78
      $region18: #{upsampling_block.3} parent=11 // pred_check_branch
        %145 = sbr.rel (%p143) target = $region20
      $region19: #{upsampling_block.3} parent=11 // pred_region
        _
      $region20: #{upsampling_block.3} parent=11 // pred_fallthru
        _
      // Predicated region
      $region21: #{upsampling_block.3} parent=11 // pred_check
        %p146 = pneg %p99
      $region22: #{upsampling_block.3} parent=11 // pred_check_branch
        %148 = sbr.rel (%p146) target = $region24
      $region23: #{upsampling_block.3} parent=11 // pred_region
        _
      $region24: #{upsampling_block.3} parent=11 // pred_fallthru
        _
    $region12: #{upsampling_block.3} parent=5 // pred_fallthru
      _
    %p149 = scmp.lt.s32.totalorder %s10, 2
    // Predicated region
    $region25: #{upsampling_block.3} parent=5 // pred_check
      %p150 = pneg %p149
    $region26: #{upsampling_block.3} parent=5 // pred_check_branch
      %152 = sbr.rel (%p150) target = $region28
    $region27: #{upsampling_block.3} parent=5 // pred_region
      // Predicated region
      $region29: #{upsampling_block.3} parent=27 // pred_check
        %p153 = pneg %p30
      $region30: #{upsampling_block.3} parent=27 // pred_check_branch
        %155 = sbr.rel (%p153) target = $region32
      $region31: #{upsampling_block.3} parent=27 // pred_region
        %p156 = scmp.lt.s32.totalorder %s10, 1
        %s157 = scalar_select %p156, %s10, 1
        %s158 = smul.addr %s157, 8
        %s159 = scalar_lea.vmem %s0, %s158
      $region32: #{upsampling_block.3} parent=27 // pred_fallthru
        _
    $region28: #{upsampling_block.3} parent=5 // pred_fallthru
      _
    %p160 = scmp.le.s32.totalorder 1, %s10
    %p161 = scmp.lt.s32.totalorder %s10, 3
    %p162 = pnand %p160, %p161
    %p163 = pneg %p162
    // Predicated region
    $region33: #{upsampling_block.3} parent=5 // pred_check
      _
    $region34: #{upsampling_block.3} parent=5 // pred_check_branch
      %165 = sbr.rel (%p162) target = $region36
    $region35: #{upsampling_block.3} parent=5 // pred_region
      %s166 = ssub.s32 %s10, 1
      %p167 = scmp.lt.s32.totalorder %s15, 1
      %s168 = scalar_select %p167, %s15, 1
      %s169 = smul.addr %s168, 8
      %s170 = scalar_lea.vmem %s0, %s169
      %p171 = pneg %p36
      %p172 = pneg %p33
      %p173 = pneg %p57
      %p174 = pneg %p54
      %p175 = pneg %p78
      %p176 = pneg %p75
      %p177 = pneg %p99
      %p178 = pneg %p96
      %p179 = pneg %p125
      %p180 = pneg %p122
      %p181 = scmp.lt.s32.totalorder %s15, 1
      %s182 = scalar_select %p181, %s15, 1
      %s183 = smul.addr %s182, 2
      %s184 = smul.addr %s183, 8
      %s185 = scalar_lea.vmem %s4, %s184
      %p186 = scmp.lt.s32.totalorder %s15, 1
      %s187 = scalar_select %p186, %s15, 1
      %s188 = smul.addr %s187, 8
      %s189 = scalar_lea.vmem %s0, %s188
      %p190 = scmp.lt.s32.totalorder %s15, 1
      %s191 = scalar_select %p190, %s15, 1
      %s192 = smul.addr %s191, 2
      %s193 = smul.addr %s192, 8
      %s194 = scalar_lea.vmem %s4, %s193
      %v195 = vld [vmem:[%s189] sm:$0xff]
      %v196 = vld [vmem:[%s1] sm:$0xff]
      %v197 = vld [vmem:[%s1 + $0x8] sm:$0xff]
      %v198 = vld [vmem:[%s1 + $0x10] sm:$0xff]
      %v199 = vld [vmem:[%s1 + $0x18] sm:$0xff]
      %v200 = vld [vmem:[%s1 + $0x20] sm:$0xff]
      %v201 = vld [vmem:[%s1 + $0x28] sm:$0xff]
      %v202 = vld [vmem:[%s1 + $0x30] sm:$0xff]
      %v203 = vld [vmem:[%s1 + $0x38] sm:$0xff]
      %v204 = vld [vmem:[%s1 + $0x40] sm:$0xff]
      %v205 = vld [vmem:[%s1 + $0x48] sm:$0xff]
      %v206 = vld [vmem:[%s1 + $0x50] sm:$0xff]
      %v207 = vld [vmem:[%s1 + $0x58] sm:$0xff]
      %v208 = vld [vmem:[%s1 + $0x60] sm:$0xff]
      %v209 = vld [vmem:[%s1 + $0x68] sm:$0xff]
      %v210 = vld [vmem:[%s1 + $0x70] sm:$0xff]
      %v211 = vld [vmem:[%s1 + $0x78] sm:$0xff]
      %v212 = vld [vmem:[%s1 + $0x80] sm:$0xff]
      %v213 = vld [vmem:[%s1 + $0x88] sm:$0xff]
      %v214 = vld [vmem:[%s1 + $0x90] sm:$0xff]
      %v215 = vld [vmem:[%s1 + $0x98] sm:$0xff]
      %v216 = vld [vmem:[%s1 + $0xa0] sm:$0xff]
      %v217 = vld [vmem:[%s1 + $0xa8] sm:$0xff]
      %v218 = vld [vmem:[%s1 + $0xb0] sm:$0xff]
      %v219 = vld [vmem:[%s1 + $0xb8] sm:$0xff]
      %v220 = vld [vmem:[%s1 + $0xc0] sm:$0xff]
      %v221 = vld [vmem:[%s1 + $0xc8] sm:$0xff]
      %v222 = vld [vmem:[%s1 + $0xd0] sm:$0xff]
      %v223 = vld [vmem:[%s1 + $0xd8] sm:$0xff]
      %v224 = vld [vmem:[%s1 + $0xe0] sm:$0xff]
      %v225 = vld [vmem:[%s1 + $0xe8] sm:$0xff]
      %v226 = vld [vmem:[%s1 + $0xf0] sm:$0xff]
      %v227 = vld [vmem:[%s1 + $0xf8] sm:$0xff]
      %228 = vmatpush.msra.mxu0 %v226
      %229 = vmatpush.msra.mxu0 %v224
      %230 = vmatpush.msra.mxu0 %v222
      %231 = vmatpush.msra.mxu0 %v220
      %232 = vmatpush.msra.mxu0 %v218
      %233 = vmatpush.msra.mxu0 %v216
      %234 = vmatpush.msra.mxu0 %v214
      %235 = vmatpush.msra.mxu0 %v212
      %236 = vmatpush.msra.mxu0 %v210
      %237 = vmatpush.msra.mxu0 %v208
      %238 = vmatpush.msra.mxu0 %v206
      %239 = vmatpush.msra.mxu0 %v204
      %240 = vmatpush.msra.mxu0 %v202
      %241 = vmatpush.msra.mxu0 %v200
      %242 = vmatpush.msra.mxu0 %v198
      %243 = vmatpush.msra.mxu0 %v196
      %244 = vmatmul.f32.gmra.mxu0 %v195
      %v245 = vpop.f32.mrf.mxu0
      %v246 = vadd.f32 0.0, %v245
      %247 = vdwg.mxu0
      %248 = vmatpush.msra.mxu0 %v227
      %249 = vmatpush.msra.mxu0 %v225
      %250 = vmatpush.msra.mxu0 %v223
      %251 = vmatpush.msra.mxu0 %v221
      %252 = vmatpush.msra.mxu0 %v219
      %253 = vmatpush.msra.mxu0 %v217
      %254 = vmatpush.msra.mxu0 %v215
      %255 = vmatpush.msra.mxu0 %v213
      %256 = vmatpush.msra.mxu0 %v211
      %257 = vmatpush.msra.mxu0 %v209
      %258 = vmatpush.msra.mxu0 %v207
      %259 = vmatpush.msra.mxu0 %v205
      %260 = vmatpush.msra.mxu0 %v203
      %261 = vmatpush.msra.mxu0 %v201
      %262 = vmatpush.msra.mxu0 %v199
      %263 = vmatpush.msra.mxu0 %v197
      %264 = vmatmul.f32.gmra.mxu0 %v195
      %v265 = vpop.f32.mrf.mxu0
      %v266 = vadd.f32 0.0, %v265
      %267 = vdwg.mxu0
      %v268 = vld [vmem:[%s2] sm:$0x3]
      %v270 = vperm.slane %v268, 0
      %v271 = vperm.slane %v268, 1
      %v274 = vmul.f32 %v246, %v270
      %v275 = vmul.f32 %v266, %v271
      %v276 = vld [vmem:[%s3] sm:$0x3]
      %v278 = vperm.slane %v276, 0
      %v279 = vperm.slane %v276, 1
      %v282 = vadd.f32 %v274, %v278
      %v283 = vadd.f32 %v275, %v279
      %v284 = vmul.f32 %v282, 0.1
      %v285 = vmul.f32 %v283, 0.1
      %v286 = vmax.f32 %v282, %v284
      %v287 = vmax.f32 %v283, %v285
      %288 = vst [vmem:[%s194] sm:$0xff] %v286
      %289 = vst [vmem:[%s194 + $0x8] sm:$0xff] %v287
      %p290 = scmp.lt.s32.totalorder %s15, 1
      %s291 = scalar_select %p290, %s15, 1
      %s292 = smul.addr %s291, 2
      %s293 = smul.addr %s292, 8
      %s294 = scalar_lea.vmem %s4, %s293
      // Predicated region
      $region37: #{upsampling_block.3} parent=35 // pred_check
        %p295 = pneg %p122
      $region38: #{upsampling_block.3} parent=35 // pred_check_branch
        %297 = sbr.rel (%p295) target = $region40
      $region39: #{upsampling_block.3} parent=35 // pred_region
        _
      $region40: #{upsampling_block.3} parent=35 // pred_fallthru
        _
    $region36: #{upsampling_block.3} parent=5 // pred_fallthru
      _
    %p298 = scmp.le.s32.totalorder 2, %s10
    // Predicated region
    $region41: #{upsampling_block.3} parent=5 // pred_check
      %p299 = pneg %p298
    $region42: #{upsampling_block.3} parent=5 // pred_check_branch
      %301 = sbr.rel (%p299) target = $region44
    $region43: #{upsampling_block.3} parent=5 // pred_region
      %s302 = ssub.s32 %s10, 2
      // Predicated region
      $region45: #{upsampling_block.3} parent=43 // pred_check
        %p303 = pneg %p128
      $region46: #{upsampling_block.3} parent=43 // pred_check_branch
        %305 = sbr.rel (%p303) target = $region48
      $region47: #{upsampling_block.3} parent=43 // pred_region
        %p306 = scmp.lt.s32.totalorder %s16, 1
        %s307 = scalar_select %p306, %s16, 1
        %s308 = smul.addr %s307, 2
        %s309 = smul.addr %s308, 8
        %s310 = scalar_lea.vmem %s4, %s309
      $region48: #{upsampling_block.3} parent=43 // pred_fallthru
        _
    $region44: #{upsampling_block.3} parent=5 // pred_fallthru
      _
  $region6: #{upsampling_block.3} parent=0 // loop_footer
    %s14 = sadd.s32 1, %s10
  $region7: #{upsampling_block.3} parent=0 // loop_footer_branch
    %9 = sbr.rel target = $region3
  $region8: #{upsampling_block.3} parent=0 // loop_exit
    _

</llo_original>
